<compile_context>
chip_gen: v6e
topology: v6e:2x2x1
jax: 0.10.0
libtpu: 0.0.40
codegen_flags: <defaults>
</compile_context>

<pallas_src>
import numpy as np
import jax
import jax.numpy as jnp
from jax.experimental import pallas as pl
from jax.experimental.pallas import tpu as pltpu


# ---------------------------------------------------------------------------
# Parameter setup (plain numpy glue, mirrors FresnelProp.__init__)
# ---------------------------------------------------------------------------
def get_wavelength(energy_kev):
    # E[keV] * lambda[nm] = 1.23984198  ->  lambda in meters
    return 1.23984198e-9 / energy_kev


def get_freqcoord(N_y, N_x, pix_wid):
    fy = np.fft.fftfreq(N_y, d=pix_wid)
    fx = np.fft.fftfreq(N_x, d=pix_wid)
    y_coord, x_coord = np.meshgrid(fy, fx, indexing="ij")
    return y_coord, x_coord


def build_fresnel_transform(N_y, N_x, pix_wid, energy, prop_dists, inverse=False):
    """Returns H of shape (D, Ny, Nx, 2) (real/imag of the Fresnel transfer function)."""
    wlength = get_wavelength(energy)
    trans = []
    for dist in prop_dists:
        pix_liml = wlength * dist / (pix_wid * min(N_y, N_x))
        pix_limh = wlength * dist / (pix_wid * max(N_y, N_x))
        if pix_wid >= pix_liml:
            y_coord, x_coord = get_freqcoord(N_y, N_x, pix_wid)
            phase_mults = -np.pi * wlength * dist
            phase_mults = -phase_mults if inverse else phase_mults
            Fxy_sq = phase_mults * (y_coord ** 2 + x_coord ** 2)
            tran = np.stack((np.cos(Fxy_sq), np.sin(Fxy_sq)), axis=-1)
        elif pix_wid <= pix_limh:
            # TODO(synk): spatial-domain Fresnel branch is unverified/raises in the
            # reference implementation; not reproduced here.
            raise ValueError("Spatial Fresnel transform branch not implemented.")
        else:
            raise ValueError("Optimal transform not found.")
        trans.append(tran.astype(np.float32))
    return np.stack(trans, axis=0)  # (D, Ny, Nx, 2)


def dft_matrices(N):
    """Forward (unnormalized) and inverse (1/N normalized) complex DFT matrices."""
    k = np.arange(N)
    ang = -2.0 * np.pi * np.outer(k, k) / N
    F = np.cos(ang) + 1j * np.sin(ang)          # fft
    G = np.conj(F) / N                          # ifft (backward norm)
    return F, G


def make_fresnel_params(N_y, N_x, pix_wid, energy, prop_dists, inverse=False):
    """Builds all device-resident constants once (hoisted out of the forward call)."""
    H = build_fresnel_transform(N_y, N_x, pix_wid, energy, prop_dists, inverse)  # (D,Ny,Nx,2)
    D = H.shape[0]

    # Transfer function in the "wide" layout: (Ny, D*Nx), column block d = H[d].
    hr_w = np.transpose(H[..., 0], (1, 0, 2)).reshape(N_y, D * N_x)
    hi_w = np.transpose(H[..., 1], (1, 0, 2)).reshape(N_y, D * N_x)

    Fy, Gy = dft_matrices(N_y)
    Fx, Gx = dft_matrices(N_x)

    def left_block(M):  # [[Mr,-Mi],[Mi,Mr]]: complex left-multiply of a [re; im] stack
        Mr, Mi = np.real(M), np.imag(M)
        return np.block([[Mr, -Mi], [Mi, Mr]])

    mfy = left_block(Fy)                       # (2Ny, 2Ny)   forward row-DFT
    mgy = left_block(Gy)                       # (2Ny, 2Ny)   inverse row-DFT
    # Forward column-DFT tiled D times along lanes -> broadcast across distances is free.
    fxr_w = np.tile(np.real(Fx), (1, D))       # (Nx, D*Nx)
    fxi_w = np.tile(np.imag(Fx), (1, D))
    # Inverse column-DFT as a block-diagonal so all D distances go through one matmul.
    bgxr = np.kron(np.eye(D), np.real(Gx))     # (D*Nx, D*Nx)
    bgxi = np.kron(np.eye(D), np.imag(Gx))

    arrs = (hr_w, hi_w, mfy, fxr_w, fxi_w, mgy, bgxr, bgxi)
    return tuple(jnp.asarray(a, dtype=jnp.float32) for a in arrs)


# ---------------------------------------------------------------------------
# Pallas kernel: one batch image per grid step, all D distances inside
# ---------------------------------------------------------------------------
def _fresnel_kernel(xs_ref, hr_ref, hi_ref, mfy_ref, fxr_ref, fxi_ref,
                    mgy_ref, bgxr_ref, bgxi_ref, out_ref):
    ny = xs_ref.shape[1] // 2

    xs = xs_ref[0]                                                        # (2Ny, Nx)  [xr; xi]

    # --- forward row-DFT: one block-matrix matmul (re/im mixed inside the MXU) ---
    t = jnp.dot(mfy_ref[...], xs, preferred_element_type=jnp.float32)    # (2Ny, Nx)

    # --- forward col-DFT, D-fold broadcast folded into the lane-tiled DFT matrices ---
    p = jnp.dot(t, fxr_ref[...], preferred_element_type=jnp.float32)     # (2Ny, D*Nx)
    q = jnp.dot(t, fxi_ref[...], preferred_element_type=jnp.float32)     # (2Ny, D*Nx)
    ur = p[:ny] - q[ny:]                                                  # Re(fft2(x)), tiled D times
    ui = q[:ny] + p[ny:]                                                  # Im(fft2(x)), tiled D times

    # --- elementwise Fresnel transfer function, all D distances in the lane dim (VPU) ---
    hr = hr_ref[...]
    hi = hi_ref[...]
    vr = ur * hr - ui * hi                                                # (Ny, D*Nx)
    vi = ur * hi + ui * hr
    vs = jnp.concatenate([vr, vi], axis=0)                                # (2Ny, D*Nx)

    # --- inverse row-DFT: one block-matrix matmul, batched over re/im and D ---
    w = jnp.dot(mgy_ref[...], vs, preferred_element_type=jnp.float32)    # (2Ny, D*Nx)

    # --- inverse col-DFT: block-diagonal Gx, one pass over all D distances ---
    pw = jnp.dot(w, bgxr_ref[...], preferred_element_type=jnp.float32)   # (2Ny, D*Nx)
    qw = jnp.dot(w, bgxi_ref[...], preferred_element_type=jnp.float32)
    out_ref[0, :ny, :] = pw[:ny] - qw[ny:]                                # Re(y) for all D
    out_ref[0, ny:, :] = qw[:ny] + pw[ny:]                                # Im(y) for all D


@jax.jit
def fresnel_forward(x, params):
    """x: (B, 1, Ny, Nx, 2) float32 -> (B, D, Ny, Nx, 2) float32."""
    hr_w, hi_w, mfy, fxr_w, fxi_w, mgy, bgxr, bgxi = params
    B = x.shape[0]
    Ny = mfy.shape[0] // 2
    Nx = fxr_w.shape[0]
    D = fxr_w.shape[1] // Nx
    assert x.shape[-1] == 2, "Last dimension of x must be 2"
    assert x.shape[2] == Ny and x.shape[3] == Nx

    # Row-stacked complex input: (B, 2*Ny, Nx) = [xr; xi] per batch.
    xs = jnp.concatenate([x[:, 0, :, :, 0], x[:, 0, :, :, 1]], axis=1)

    img_spec = pl.BlockSpec((1, 2 * Ny, Nx), lambda b: (b, 0, 0))
    h_spec = pl.BlockSpec((Ny, D * Nx), lambda b: (0, 0))
    mat2_spec = pl.BlockSpec((2 * Ny, 2 * Ny), lambda b: (0, 0))
    fx_spec = pl.BlockSpec((Nx, D * Nx), lambda b: (0, 0))
    bgx_spec = pl.BlockSpec((D * Nx, D * Nx), lambda b: (0, 0))
    out_spec = pl.BlockSpec((1, 2 * Ny, D * Nx), lambda b: (b, 0, 0))

    ys = pl.pallas_call(
        _fresnel_kernel,
        out_shape=jax.ShapeDtypeStruct((B, 2 * Ny, D * Nx), jnp.float32),
        grid=(B,),
        in_specs=[img_spec,            # xs
                  h_spec, h_spec,      # H re/im (wide)
                  mat2_spec,           # forward row-DFT block matrix
                  fx_spec, fx_spec,    # forward col-DFT re/im (lane-tiled over D)
                  mat2_spec,           # inverse row-DFT block matrix
                  bgx_spec, bgx_spec], # inverse col-DFT re/im (block-diagonal over D)
        out_specs=out_spec,
        compiler_params=pltpu.CompilerParams(
            dimension_semantics=("parallel",),          # lets v7x's 2 TCs split over B
            vmem_limit_bytes=32 * 1024 * 1024),         # explicit (v5e default is 16 MiB)
    )(xs, hr_w, hi_w, mfy, fxr_w, fxi_w, mgy, bgxr, bgxi)

    # (B, 2*Ny, D*Nx) -> (B, D, Ny, Nx, 2): tiny one-shot relayout in XLA.
    y = ys.reshape(B, 2, Ny, D, Nx).transpose(0, 3, 2, 4, 1)
    return y


# ---------------------------------------------------------------------------
if __name__ == "__main__":
    # small, deterministic configuration
    B, Ny, Nx = 2, 16, 16
    pix_wid = 1.0e-6                     # 1 micron pixels
    energy = 20.0                        # keV
    prop_dists = np.array([0.05, 0.1, 0.2], dtype=np.float32)   # meters
    D = len(prop_dists)

    params = make_fresnel_params(Ny, Nx, pix_wid, energy, prop_dists)

    key = jax.random.PRNGKey(0)
    x = jax.random.normal(key, (B, 1, Ny, Nx, 2), dtype=jnp.float32)

    y = fresnel_forward(x, params)
    y = jax.block_until_ready(y)

    # reference: y = ifft2( fft2(x) * H ) with broadcasting over (B, D), in float64
    H = build_fresnel_transform(Ny, Nx, pix_wid, energy, prop_dists)    # (D, Ny, Nx, 2)
    xn = np.asarray(x, dtype=np.float64)
    xc = xn[..., 0] + 1j * xn[..., 1]                                   # (B, 1, Ny, Nx)
    hc = (H[..., 0].astype(np.float64) + 1j * H[..., 1].astype(np.float64))[np.newaxis]
    yc_ref = np.fft.ifft2(np.fft.fft2(xc) * hc)                         # (B, D, Ny, Nx)
    y_ref = np.stack((yc_ref.real, yc_ref.imag), axis=-1).astype(np.float32)

    np.testing.assert_allclose(np.asarray(y), y_ref, atol=1e-3, rtol=1e-3)
    assert y.shape == (B, D, Ny, Nx, 2)

    print("KERNEL_OK")
</pallas_src>

<mosaic_0001>
module attributes {stable_mosaic.version = 11 : i64} {
  func.func @_fresnel_kernel(%arg0: i32, %arg1: memref<1x32x16xf32, #tpu.memory_space<vmem>>, %arg2: memref<16x48xf32, #tpu.memory_space<vmem>>, %arg3: memref<16x48xf32, #tpu.memory_space<vmem>>, %arg4: memref<32x32xf32, #tpu.memory_space<vmem>>, %arg5: memref<16x48xf32, #tpu.memory_space<vmem>>, %arg6: memref<16x48xf32, #tpu.memory_space<vmem>>, %arg7: memref<32x32xf32, #tpu.memory_space<vmem>>, %arg8: memref<48x48xf32, #tpu.memory_space<vmem>>, %arg9: memref<48x48xf32, #tpu.memory_space<vmem>>, %arg10: memref<1x32x48xf32, #tpu.memory_space<vmem>>) attributes {dimension_semantics = [#tpu.dimension_semantics<parallel>], iteration_bounds = array<i64: 2>, scalar_prefetch = 0 : i64, scratch_operands = 0 : i64, tpu.core_type = #tpu.core_type<tc>, window_params = [{transform_indices = @transform_0, window_bounds = array<i64: 1, 32, 16>}, {pipeline_mode = #tpu.pipeline_mode<synchronous>, transform_indices = @transform_1, window_bounds = array<i64: 16, 48>}, {pipeline_mode = #tpu.pipeline_mode<synchronous>, transform_indices = @transform_2, window_bounds = array<i64: 16, 48>}, {pipeline_mode = #tpu.pipeline_mode<synchronous>, transform_indices = @transform_3, window_bounds = array<i64: 32, 32>}, {pipeline_mode = #tpu.pipeline_mode<synchronous>, transform_indices = @transform_4, window_bounds = array<i64: 16, 48>}, {pipeline_mode = #tpu.pipeline_mode<synchronous>, transform_indices = @transform_5, window_bounds = array<i64: 16, 48>}, {pipeline_mode = #tpu.pipeline_mode<synchronous>, transform_indices = @transform_6, window_bounds = array<i64: 32, 32>}, {pipeline_mode = #tpu.pipeline_mode<synchronous>, transform_indices = @transform_7, window_bounds = array<i64: 48, 48>}, {pipeline_mode = #tpu.pipeline_mode<synchronous>, transform_indices = @transform_8, window_bounds = array<i64: 48, 48>}, {transform_indices = @transform_9, window_bounds = array<i64: 1, 32, 48>}]} {
    %c0 = arith.constant 0 : index
    %c0_0 = arith.constant 0 : index
    %c0_1 = arith.constant 0 : index
    %0 = vector.load %arg1[%c0, %c0_0, %c0_1] : memref<1x32x16xf32, #tpu.memory_space<vmem>>, vector<1x32x16xf32>
    %1 = vector.shape_cast %0 : vector<1x32x16xf32> to vector<32x16xf32>
    %c0_2 = arith.constant 0 : index
    %c0_3 = arith.constant 0 : index
    %2 = vector.load %arg4[%c0_2, %c0_3] : memref<32x32xf32, #tpu.memory_space<vmem>>, vector<32x32xf32>
    %cst = arith.constant dense<0.000000e+00> : vector<32x16xf32>
    %3 = tpu.matmul %2, %1, %cst {dimension_numbers = #tpu.dot_dimension_numbers<[1], [0], [0], [1], [0, 0, 1, 1], [], []>} : vector<32x32xf32>, vector<32x16xf32>, vector<32x16xf32> -> vector<32x16xf32>
    %c0_4 = arith.constant 0 : index
    %c0_5 = arith.constant 0 : index
    %4 = vector.load %arg5[%c0_4, %c0_5] : memref<16x48xf32, #tpu.memory_space<vmem>>, vector<16x48xf32>
    %cst_6 = arith.constant dense<0.000000e+00> : vector<32x48xf32>
    %5 = tpu.matmul %3, %4, %cst_6 {dimension_numbers = #tpu.dot_dimension_numbers<[1], [0], [0], [1], [0, 0, 1, 1], [], []>} : vector<32x16xf32>, vector<16x48xf32>, vector<32x48xf32> -> vector<32x48xf32>
    %c0_7 = arith.constant 0 : index
    %c0_8 = arith.constant 0 : index
    %6 = vector.load %arg6[%c0_7, %c0_8] : memref<16x48xf32, #tpu.memory_space<vmem>>, vector<16x48xf32>
    %cst_9 = arith.constant dense<0.000000e+00> : vector<32x48xf32>
    %7 = tpu.matmul %3, %6, %cst_9 {dimension_numbers = #tpu.dot_dimension_numbers<[1], [0], [0], [1], [0, 0, 1, 1], [], []>} : vector<32x16xf32>, vector<16x48xf32>, vector<32x48xf32> -> vector<32x48xf32>
    %8 = vector.extract_strided_slice %5 {offsets = [0, 0], sizes = [16, 48], strides = [1, 1]} : vector<32x48xf32> to vector<16x48xf32>
    %9 = vector.extract_strided_slice %7 {offsets = [16, 0], sizes = [16, 48], strides = [1, 1]} : vector<32x48xf32> to vector<16x48xf32>
    %10 = arith.subf %8, %9 : vector<16x48xf32>
    %11 = vector.extract_strided_slice %7 {offsets = [0, 0], sizes = [16, 48], strides = [1, 1]} : vector<32x48xf32> to vector<16x48xf32>
    %12 = vector.extract_strided_slice %5 {offsets = [16, 0], sizes = [16, 48], strides = [1, 1]} : vector<32x48xf32> to vector<16x48xf32>
    %13 = arith.addf %11, %12 : vector<16x48xf32>
    %c0_10 = arith.constant 0 : index
    %c0_11 = arith.constant 0 : index
    %14 = vector.load %arg2[%c0_10, %c0_11] : memref<16x48xf32, #tpu.memory_space<vmem>>, vector<16x48xf32>
    %c0_12 = arith.constant 0 : index
    %c0_13 = arith.constant 0 : index
    %15 = vector.load %arg3[%c0_12, %c0_13] : memref<16x48xf32, #tpu.memory_space<vmem>>, vector<16x48xf32>
    %16 = arith.mulf %10, %14 : vector<16x48xf32>
    %17 = arith.mulf %13, %15 : vector<16x48xf32>
    %18 = arith.subf %16, %17 : vector<16x48xf32>
    %19 = arith.mulf %10, %15 : vector<16x48xf32>
    %20 = arith.mulf %13, %14 : vector<16x48xf32>
    %21 = arith.addf %19, %20 : vector<16x48xf32>
    %22 = tpu.concatenate %18, %21 in 0 : vector<16x48xf32>, vector<16x48xf32> -> vector<32x48xf32>
    %c0_14 = arith.constant 0 : index
    %c0_15 = arith.constant 0 : index
    %23 = vector.load %arg7[%c0_14, %c0_15] : memref<32x32xf32, #tpu.memory_space<vmem>>, vector<32x32xf32>
    %cst_16 = arith.constant dense<0.000000e+00> : vector<32x48xf32>
    %24 = tpu.matmul %23, %22, %cst_16 {dimension_numbers = #tpu.dot_dimension_numbers<[1], [0], [0], [1], [0, 0, 1, 1], [], []>} : vector<32x32xf32>, vector<32x48xf32>, vector<32x48xf32> -> vector<32x48xf32>
    %c0_17 = arith.constant 0 : index
    %c0_18 = arith.constant 0 : index
    %25 = vector.load %arg8[%c0_17, %c0_18] : memref<48x48xf32, #tpu.memory_space<vmem>>, vector<48x48xf32>
    %cst_19 = arith.constant dense<0.000000e+00> : vector<32x48xf32>
    %26 = tpu.matmul %24, %25, %cst_19 {dimension_numbers = #tpu.dot_dimension_numbers<[1], [0], [0], [1], [0, 0, 1, 1], [], []>} : vector<32x48xf32>, vector<48x48xf32>, vector<32x48xf32> -> vector<32x48xf32>
    %c0_20 = arith.constant 0 : index
    %c0_21 = arith.constant 0 : index
    %27 = vector.load %arg9[%c0_20, %c0_21] : memref<48x48xf32, #tpu.memory_space<vmem>>, vector<48x48xf32>
    %cst_22 = arith.constant dense<0.000000e+00> : vector<32x48xf32>
    %28 = tpu.matmul %24, %27, %cst_22 {dimension_numbers = #tpu.dot_dimension_numbers<[1], [0], [0], [1], [0, 0, 1, 1], [], []>} : vector<32x48xf32>, vector<48x48xf32>, vector<32x48xf32> -> vector<32x48xf32>
    %29 = vector.extract_strided_slice %26 {offsets = [0, 0], sizes = [16, 48], strides = [1, 1]} : vector<32x48xf32> to vector<16x48xf32>
    %30 = vector.extract_strided_slice %28 {offsets = [16, 0], sizes = [16, 48], strides = [1, 1]} : vector<32x48xf32> to vector<16x48xf32>
    %31 = arith.subf %29, %30 : vector<16x48xf32>
    %c0_23 = arith.constant 0 : index
    %c0_24 = arith.constant 0 : index
    %c0_25 = arith.constant 0 : index
    %32 = vector.load %arg10[%c0_23, %c0_24, %c0_25] : memref<1x32x48xf32, #tpu.memory_space<vmem>>, vector<1x16x48xf32>
    %33 = vector.shape_cast %32 : vector<1x16x48xf32> to vector<16x48xf32>
    %34 = vector.shape_cast %31 : vector<16x48xf32> to vector<1x16x48xf32>
    tpu.vector_store %arg10[%c0_23, %c0_24, %c0_25], %34 {strides = array<i32>} : memref<1x32x48xf32, #tpu.memory_space<vmem>>, vector<1x16x48xf32>,
    %35 = vector.extract_strided_slice %28 {offsets = [0, 0], sizes = [16, 48], strides = [1, 1]} : vector<32x48xf32> to vector<16x48xf32>
    %36 = vector.extract_strided_slice %26 {offsets = [16, 0], sizes = [16, 48], strides = [1, 1]} : vector<32x48xf32> to vector<16x48xf32>
    %37 = arith.addf %35, %36 : vector<16x48xf32>
    %c0_26 = arith.constant 0 : index
    %c16 = arith.constant 16 : index
    %c0_27 = arith.constant 0 : index
    %38 = vector.load %arg10[%c0_26, %c16, %c0_27] : memref<1x32x48xf32, #tpu.memory_space<vmem>>, vector<1x16x48xf32>
    %39 = vector.shape_cast %38 : vector<1x16x48xf32> to vector<16x48xf32>
    %40 = vector.shape_cast %37 : vector<16x48xf32> to vector<1x16x48xf32>
    tpu.vector_store %arg10[%c0_26, %c16, %c0_27], %40 {strides = array<i32>} : memref<1x32x48xf32, #tpu.memory_space<vmem>>, vector<1x16x48xf32>,
    return
  }
  func.func @transform_0(%arg0: i32) -> (i32, i32, i32) {
    %c0_i32 = arith.constant 0 : i32
    %c0_i32_0 = arith.constant 0 : i32
    %c0_i32_1 = arith.constant 0 : i32
    return %arg0, %c0_i32, %c0_i32_0 : i32, i32, i32
  }
  func.func @transform_1(%arg0: i32) -> (i32, i32) {
    %c0_i32 = arith.constant 0 : i32
    %c0_i32_0 = arith.constant 0 : i32
    %c0_i32_1 = arith.constant 0 : i32
    return %c0_i32, %c0_i32_0 : i32, i32
  }
  func.func @transform_2(%arg0: i32) -> (i32, i32) {
    %c0_i32 = arith.constant 0 : i32
    %c0_i32_0 = arith.constant 0 : i32
    %c0_i32_1 = arith.constant 0 : i32
    return %c0_i32, %c0_i32_0 : i32, i32
  }
  func.func @transform_3(%arg0: i32) -> (i32, i32) {
    %c0_i32 = arith.constant 0 : i32
    %c0_i32_0 = arith.constant 0 : i32
    %c0_i32_1 = arith.constant 0 : i32
    return %c0_i32, %c0_i32_0 : i32, i32
  }
  func.func @transform_4(%arg0: i32) -> (i32, i32) {
    %c0_i32 = arith.constant 0 : i32
    %c0_i32_0 = arith.constant 0 : i32
    %c0_i32_1 = arith.constant 0 : i32
    return %c0_i32, %c0_i32_0 : i32, i32
  }
  func.func @transform_5(%arg0: i32) -> (i32, i32) {
    %c0_i32 = arith.constant 0 : i32
    %c0_i32_0 = arith.constant 0 : i32
    %c0_i32_1 = arith.constant 0 : i32
    return %c0_i32, %c0_i32_0 : i32, i32
  }
  func.func @transform_6(%arg0: i32) -> (i32, i32) {
    %c0_i32 = arith.constant 0 : i32
    %c0_i32_0 = arith.constant 0 : i32
    %c0_i32_1 = arith.constant 0 : i32
    return %c0_i32, %c0_i32_0 : i32, i32
  }
  func.func @transform_7(%arg0: i32) -> (i32, i32) {
    %c0_i32 = arith.constant 0 : i32
    %c0_i32_0 = arith.constant 0 : i32
    %c0_i32_1 = arith.constant 0 : i32
    return %c0_i32, %c0_i32_0 : i32, i32
  }
  func.func @transform_8(%arg0: i32) -> (i32, i32) {
    %c0_i32 = arith.constant 0 : i32
    %c0_i32_0 = arith.constant 0 : i32
    %c0_i32_1 = arith.constant 0 : i32
    return %c0_i32, %c0_i32_0 : i32, i32
  }
  func.func @transform_9(%arg0: i32) -> (i32, i32, i32) {
    %c0_i32 = arith.constant 0 : i32
    %c0_i32_0 = arith.constant 0 : i32
    %c0_i32_1 = arith.constant 0 : i32
    return %arg0, %c0_i32, %c0_i32_0 : i32, i32, i32
  }
}

</mosaic_0001>

<llo_original>
// kernel: fresnel_forward.1
$region0: #{fresnel_forward.1}
  #allocation0 [shape = 'u32[]', space=smem, size = 0x4, offset = 0x4, fixed_abs, tag = 'smem constant byte address 0x4 - core index']
  #allocation1 [shape = 'u32[144,128]{1,0:T(1,128)}', space=vmem, size = 0x12000, scoped, tag = 'internal scratch']
  %s0 = inlined_call_operand.vmem [shape: f32[2,32,16], index: 0, kind: input, shape index: {}]
  %s1 = inlined_call_operand.vmem [shape: f32[16,48], index: 1, kind: input, shape index: {}]
  %s2 = inlined_call_operand.vmem [shape: f32[16,48], index: 2, kind: input, shape index: {}]
  %s3 = inlined_call_operand.vmem [shape: f32[32,32], index: 3, kind: input, shape index: {}]
  %s4 = inlined_call_operand.vmem [shape: f32[16,48], index: 4, kind: input, shape index: {}]
  %s5 = inlined_call_operand.vmem [shape: f32[16,48], index: 5, kind: input, shape index: {}]
  %s6 = inlined_call_operand.vmem [shape: f32[32,32], index: 6, kind: input, shape index: {}]
  %s7 = inlined_call_operand.vmem [shape: f32[48,48], index: 7, kind: input, shape index: {}]
  %s8 = inlined_call_operand.vmem [shape: f32[48,48], index: 8, kind: input, shape index: {}]
  %s9 = inlined_call_operand.vmem [shape: f32[2,32,48], index: 9, kind: output, shape index: {}]
  %s10 = sld [smem:[#allocation0]]
  $region69: #{fresnel_forward.1} parent=0
    _
  %s12 = ssub.s32 1, %s10
  %s13 = scalar_select 0, %s12, %s10
  loop: start=0, step=1, limit=4
  $region2: #{fresnel_forward.1} parent=0 // loop_pre_header
    _
  $region3: #{fresnel_forward.1} parent=0 // loop_header
    %s15 = sphi 0, %s19
    %p16 = scmp.ge.s32.totalorder %s15, 4
    %s25 = sphi 0, %s27
    %s28 = sphi 0, %s25
    %s29 = sphi 0, %s28
    %s45 = sphi 0, %s29
    %s49 = sphi 0, %s49
    %s51 = sphi 0, %s49
    %s52 = sphi 0, %s51
    %s66 = sphi 0, %s52
    %s70 = sphi 0, %s70
    %s72 = sphi 0, %s70
    %s73 = sphi 0, %s72
    %s87 = sphi 0, %s73
    %s91 = sphi 0, %s91
    %s93 = sphi 0, %s91
    %s94 = sphi 0, %s93
    %s108 = sphi 0, %s94
    %s112 = sphi 0, %s112
    %s114 = sphi 0, %s112
    %s115 = sphi 0, %s114
    %s129 = sphi 0, %s115
    %s133 = sphi 0, %s133
    %s135 = sphi 0, %s133
    %s136 = sphi 0, %s135
    %s150 = sphi 0, %s136
    %s154 = sphi 0, %s154
    %s156 = sphi 0, %s154
    %s157 = sphi 0, %s156
    %s171 = sphi 0, %s157
    %s175 = sphi 0, %s175
    %s177 = sphi 0, %s175
    %s178 = sphi 0, %s177
    %s192 = sphi 0, %s178
    %s196 = sphi 0, %s196
    %s198 = sphi 0, %s196
    %s199 = sphi 0, %s198
    %s213 = sphi 0, %s199
    %s219 = sphi 0, %s221
    %s222 = sphi 0, %s219
    %s223 = sphi 0, %s222
    %s239 = sphi 0, %s223
  $region4: #{fresnel_forward.1} parent=0 // loop_header_branch
    %18 = sbr.rel (%p16) target = $region8
  $region5: #{fresnel_forward.1} parent=0 // loop_body
    %s20 = ssub.s32 %s15, 1
    %s21 = ssub.s32 %s15, 2
    %s22 = sadd.s32 %s15, 1
    %s23 = ssub.s32 %s15, %s22
    %p24 = scmp.eq.s32.totalorder %s23, 0
    %s26 = sadd.s32 %s25, 1
    %s27 = scalar_select %p24, %s25, %s26
    %p30 = pneg %p24
    %p31 = scmp.eq.s32.totalorder %s15, 1
    %p32 = por %p30, %p31
    %p33 = scmp.ne.s32.totalorder %s25, %s28
    %p34 = scmp.eq.s32.totalorder %s15, 0
    %p35 = por %p33, %p34
    %p36 = scmp.ne.s32.totalorder %s25, %s28
    %p37 = scmp.eq.s32.totalorder %s20, 1
    %p38 = por %p36, %p37
    %p39 = scmp.ne.s32.totalorder %s28, %s29
    %p40 = scmp.eq.s32.totalorder %s20, 0
    %p41 = por %p39, %p40
    %p42 = scmp.ne.s32.totalorder %s28, %s29
    %p43 = scmp.eq.s32.totalorder %s21, 1
    %p44 = por %p42, %p43
    %p46 = scmp.ne.s32.totalorder %s29, %s45
    %p47 = scmp.eq.s32.totalorder %s21, 0
    %p48 = por %p46, %p47
    %s50 = sadd.s32 %s49, 1
    %p53 = scmp.eq.s32.totalorder %s15, 1
    %p54 = scmp.ne.s32.totalorder %s49, %s51
    %p55 = scmp.eq.s32.totalorder %s15, 0
    %p56 = por %p54, %p55
    %p57 = scmp.ne.s32.totalorder %s49, %s51
    %p58 = scmp.eq.s32.totalorder %s20, 1
    %p59 = por %p57, %p58
    %p60 = scmp.ne.s32.totalorder %s51, %s52
    %p61 = scmp.eq.s32.totalorder %s20, 0
    %p62 = por %p60, %p61
    %p63 = scmp.ne.s32.totalorder %s51, %s52
    %p64 = scmp.eq.s32.totalorder %s21, 1
    %p65 = por %p63, %p64
    %p67 = scmp.ne.s32.totalorder %s52, %s66
    %p68 = scmp.eq.s32.totalorder %s21, 0
    %p69 = por %p67, %p68
    %s71 = sadd.s32 %s70, 1
    %p74 = scmp.eq.s32.totalorder %s15, 1
    %p75 = scmp.ne.s32.totalorder %s70, %s72
    %p76 = scmp.eq.s32.totalorder %s15, 0
    %p77 = por %p75, %p76
    %p78 = scmp.ne.s32.totalorder %s70, %s72
    %p79 = scmp.eq.s32.totalorder %s20, 1
    %p80 = por %p78, %p79
    %p81 = scmp.ne.s32.totalorder %s72, %s73
    %p82 = scmp.eq.s32.totalorder %s20, 0
    %p83 = por %p81, %p82
    %p84 = scmp.ne.s32.totalorder %s72, %s73
    %p85 = scmp.eq.s32.totalorder %s21, 1
    %p86 = por %p84, %p85
    %p88 = scmp.ne.s32.totalorder %s73, %s87
    %p89 = scmp.eq.s32.totalorder %s21, 0
    %p90 = por %p88, %p89
    %s92 = sadd.s32 %s91, 1
    %p95 = scmp.eq.s32.totalorder %s15, 1
    %p96 = scmp.ne.s32.totalorder %s91, %s93
    %p97 = scmp.eq.s32.totalorder %s15, 0
    %p98 = por %p96, %p97
    %p99 = scmp.ne.s32.totalorder %s91, %s93
    %p100 = scmp.eq.s32.totalorder %s20, 1
    %p101 = por %p99, %p100
    %p102 = scmp.ne.s32.totalorder %s93, %s94
    %p103 = scmp.eq.s32.totalorder %s20, 0
    %p104 = por %p102, %p103
    %p105 = scmp.ne.s32.totalorder %s93, %s94
    %p106 = scmp.eq.s32.totalorder %s21, 1
    %p107 = por %p105, %p106
    %p109 = scmp.ne.s32.totalorder %s94, %s108
    %p110 = scmp.eq.s32.totalorder %s21, 0
    %p111 = por %p109, %p110
    %s113 = sadd.s32 %s112, 1
    %p116 = scmp.eq.s32.totalorder %s15, 1
    %p117 = scmp.ne.s32.totalorder %s112, %s114
    %p118 = scmp.eq.s32.totalorder %s15, 0
    %p119 = por %p117, %p118
    %p120 = scmp.ne.s32.totalorder %s112, %s114
    %p121 = scmp.eq.s32.totalorder %s20, 1
    %p122 = por %p120, %p121
    %p123 = scmp.ne.s32.totalorder %s114, %s115
    %p124 = scmp.eq.s32.totalorder %s20, 0
    %p125 = por %p123, %p124
    %p126 = scmp.ne.s32.totalorder %s114, %s115
    %p127 = scmp.eq.s32.totalorder %s21, 1
    %p128 = por %p126, %p127
    %p130 = scmp.ne.s32.totalorder %s115, %s129
    %p131 = scmp.eq.s32.totalorder %s21, 0
    %p132 = por %p130, %p131
    %s134 = sadd.s32 %s133, 1
    %p137 = scmp.eq.s32.totalorder %s15, 1
    %p138 = scmp.ne.s32.totalorder %s133, %s135
    %p139 = scmp.eq.s32.totalorder %s15, 0
    %p140 = por %p138, %p139
    %p141 = scmp.ne.s32.totalorder %s133, %s135
    %p142 = scmp.eq.s32.totalorder %s20, 1
    %p143 = por %p141, %p142
    %p144 = scmp.ne.s32.totalorder %s135, %s136
    %p145 = scmp.eq.s32.totalorder %s20, 0
    %p146 = por %p144, %p145
    %p147 = scmp.ne.s32.totalorder %s135, %s136
    %p148 = scmp.eq.s32.totalorder %s21, 1
    %p149 = por %p147, %p148
    %p151 = scmp.ne.s32.totalorder %s136, %s150
    %p152 = scmp.eq.s32.totalorder %s21, 0
    %p153 = por %p151, %p152
    %s155 = sadd.s32 %s154, 1
    %p158 = scmp.eq.s32.totalorder %s15, 1
    %p159 = scmp.ne.s32.totalorder %s154, %s156
    %p160 = scmp.eq.s32.totalorder %s15, 0
    %p161 = por %p159, %p160
    %p162 = scmp.ne.s32.totalorder %s154, %s156
    %p163 = scmp.eq.s32.totalorder %s20, 1
    %p164 = por %p162, %p163
    %p165 = scmp.ne.s32.totalorder %s156, %s157
    %p166 = scmp.eq.s32.totalorder %s20, 0
    %p167 = por %p165, %p166
    %p168 = scmp.ne.s32.totalorder %s156, %s157
    %p169 = scmp.eq.s32.totalorder %s21, 1
    %p170 = por %p168, %p169
    %p172 = scmp.ne.s32.totalorder %s157, %s171
    %p173 = scmp.eq.s32.totalorder %s21, 0
    %p174 = por %p172, %p173
    %s176 = sadd.s32 %s175, 1
    %p179 = scmp.eq.s32.totalorder %s15, 1
    %p180 = scmp.ne.s32.totalorder %s175, %s177
    %p181 = scmp.eq.s32.totalorder %s15, 0
    %p182 = por %p180, %p181
    %p183 = scmp.ne.s32.totalorder %s175, %s177
    %p184 = scmp.eq.s32.totalorder %s20, 1
    %p185 = por %p183, %p184
    %p186 = scmp.ne.s32.totalorder %s177, %s178
    %p187 = scmp.eq.s32.totalorder %s20, 0
    %p188 = por %p186, %p187
    %p189 = scmp.ne.s32.totalorder %s177, %s178
    %p190 = scmp.eq.s32.totalorder %s21, 1
    %p191 = por %p189, %p190
    %p193 = scmp.ne.s32.totalorder %s178, %s192
    %p194 = scmp.eq.s32.totalorder %s21, 0
    %p195 = por %p193, %p194
    %s197 = sadd.s32 %s196, 1
    %p200 = scmp.eq.s32.totalorder %s15, 1
    %p201 = scmp.ne.s32.totalorder %s196, %s198
    %p202 = scmp.eq.s32.totalorder %s15, 0
    %p203 = por %p201, %p202
    %p204 = scmp.ne.s32.totalorder %s196, %s198
    %p205 = scmp.eq.s32.totalorder %s20, 1
    %p206 = por %p204, %p205
    %p207 = scmp.ne.s32.totalorder %s198, %s199
    %p208 = scmp.eq.s32.totalorder %s20, 0
    %p209 = por %p207, %p208
    %p210 = scmp.ne.s32.totalorder %s198, %s199
    %p211 = scmp.eq.s32.totalorder %s21, 1
    %p212 = por %p210, %p211
    %p214 = scmp.ne.s32.totalorder %s199, %s213
    %p215 = scmp.eq.s32.totalorder %s21, 0
    %p216 = por %p214, %p215
    %s217 = ssub.s32 %s15, %s22
    %p218 = scmp.eq.s32.totalorder %s217, 0
    %s220 = sadd.s32 %s219, 1
    %s221 = scalar_select %p218, %s219, %s220
    %p224 = pneg %p218
    %p225 = scmp.eq.s32.totalorder %s15, 1
    %p226 = por %p224, %p225
    %p227 = scmp.ne.s32.totalorder %s219, %s222
    %p228 = scmp.eq.s32.totalorder %s15, 0
    %p229 = por %p227, %p228
    %p230 = scmp.ne.s32.totalorder %s219, %s222
    %p231 = scmp.eq.s32.totalorder %s20, 1
    %p232 = por %p230, %p231
    %p233 = scmp.ne.s32.totalorder %s222, %s223
    %p234 = scmp.eq.s32.totalorder %s20, 0
    %p235 = por %p233, %p234
    %p236 = scmp.ne.s32.totalorder %s222, %s223
    %p237 = scmp.eq.s32.totalorder %s21, 1
    %p238 = por %p236, %p237
    %p240 = scmp.ne.s32.totalorder %s223, %s239
    %p241 = scmp.eq.s32.totalorder %s21, 0
    %p242 = por %p240, %p241
    %p243 = scmp.le.s32.totalorder 1, %s15
    %p244 = scmp.lt.s32.totalorder %s15, 3
    %p245 = pnand %p243, %p244
    %p246 = pneg %p245
    // Predicated region
    $region9: #{fresnel_forward.1} parent=5 // pred_check
      _
    $region10: #{fresnel_forward.1} parent=5 // pred_check_branch
      %248 = sbr.rel (%p245) target = $region12
    $region11: #{fresnel_forward.1} parent=5 // pred_region
      %s249 = ssub.s32 %s15, 1
      // Predicated region
      $region13: #{fresnel_forward.1} parent=11 // pred_check
        %p250 = pneg %p62
      $region14: #{fresnel_forward.1} parent=11 // pred_check_branch
        %252 = sbr.rel (%p250) target = $region16
      $region15: #{fresnel_forward.1} parent=11 // pred_region
        _
      $region16: #{fresnel_forward.1} parent=11 // pred_fallthru
        _
      // Predicated region
      $region17: #{fresnel_forward.1} parent=11 // pred_check
        %p253 = pneg %p83
      $region18: #{fresnel_forward.1} parent=11 // pred_check_branch
        %255 = sbr.rel (%p253) target = $region20
      $region19: #{fresnel_forward.1} parent=11 // pred_region
        _
      $region20: #{fresnel_forward.1} parent=11 // pred_fallthru
        _
      // Predicated region
      $region21: #{fresnel_forward.1} parent=11 // pred_check
        %p256 = pneg %p104
      $region22: #{fresnel_forward.1} parent=11 // pred_check_branch
        %258 = sbr.rel (%p256) target = $region24
      $region23: #{fresnel_forward.1} parent=11 // pred_region
        _
      $region24: #{fresnel_forward.1} parent=11 // pred_fallthru
        _
      // Predicated region
      $region25: #{fresnel_forward.1} parent=11 // pred_check
        %p259 = pneg %p125
      $region26: #{fresnel_forward.1} parent=11 // pred_check_branch
        %261 = sbr.rel (%p259) target = $region28
      $region27: #{fresnel_forward.1} parent=11 // pred_region
        _
      $region28: #{fresnel_forward.1} parent=11 // pred_fallthru
        _
      // Predicated region
      $region29: #{fresnel_forward.1} parent=11 // pred_check
        %p262 = pneg %p146
      $region30: #{fresnel_forward.1} parent=11 // pred_check_branch
        %264 = sbr.rel (%p262) target = $region32
      $region31: #{fresnel_forward.1} parent=11 // pred_region
        _
      $region32: #{fresnel_forward.1} parent=11 // pred_fallthru
        _
      // Predicated region
      $region33: #{fresnel_forward.1} parent=11 // pred_check
        %p265 = pneg %p167
      $region34: #{fresnel_forward.1} parent=11 // pred_check_branch
        %267 = sbr.rel (%p265) target = $region36
      $region35: #{fresnel_forward.1} parent=11 // pred_region
        _
      $region36: #{fresnel_forward.1} parent=11 // pred_fallthru
        _
      // Predicated region
      $region37: #{fresnel_forward.1} parent=11 // pred_check
        %p268 = pneg %p188
      $region38: #{fresnel_forward.1} parent=11 // pred_check_branch
        %270 = sbr.rel (%p268) target = $region40
      $region39: #{fresnel_forward.1} parent=11 // pred_region
        _
      $region40: #{fresnel_forward.1} parent=11 // pred_fallthru
        _
      // Predicated region
      $region41: #{fresnel_forward.1} parent=11 // pred_check
        %p271 = pneg %p209
      $region42: #{fresnel_forward.1} parent=11 // pred_check_branch
        %273 = sbr.rel (%p271) target = $region44
      $region43: #{fresnel_forward.1} parent=11 // pred_region
        _
      $region44: #{fresnel_forward.1} parent=11 // pred_fallthru
        _
    $region12: #{fresnel_forward.1} parent=5 // pred_fallthru
      _
    %p274 = scmp.lt.s32.totalorder %s15, 2
    // Predicated region
    $region45: #{fresnel_forward.1} parent=5 // pred_check
      %p275 = pneg %p274
    $region46: #{fresnel_forward.1} parent=5 // pred_check_branch
      %277 = sbr.rel (%p275) target = $region48
    $region47: #{fresnel_forward.1} parent=5 // pred_region
      // Predicated region
      $region49: #{fresnel_forward.1} parent=47 // pred_check
        %p278 = pneg %p35
      $region50: #{fresnel_forward.1} parent=47 // pred_check_branch
        %280 = sbr.rel (%p278) target = $region52
      $region51: #{fresnel_forward.1} parent=47 // pred_region
        %p281 = scmp.lt.s32.totalorder %s15, 1
        %s282 = scalar_select %p281, %s15, 1
        %s283 = smul.addr %s282, 4
        %s284 = smul.addr %s283, 8
        %s285 = scalar_lea.vmem %s0, %s284
      $region52: #{fresnel_forward.1} parent=47 // pred_fallthru
        _
    $region48: #{fresnel_forward.1} parent=5 // pred_fallthru
      _
    %p286 = scmp.le.s32.totalorder 1, %s15
    %p287 = scmp.lt.s32.totalorder %s15, 3
    %p288 = pnand %p286, %p287
    %p289 = pneg %p288
    // Predicated region
    $region53: #{fresnel_forward.1} parent=5 // pred_check
      _
    $region54: #{fresnel_forward.1} parent=5 // pred_check_branch
      %291 = sbr.rel (%p288) target = $region56
    $region55: #{fresnel_forward.1} parent=5 // pred_region
      %s292 = ssub.s32 %s15, 1
      %p293 = scmp.lt.s32.totalorder %s20, 1
      %s294 = scalar_select %p293, %s20, 1
      %s295 = smul.addr %s294, 4
      %s296 = smul.addr %s295, 8
      %s297 = scalar_lea.vmem %s0, %s296
      %p298 = pneg %p41
      %p299 = pneg %p38
      %p300 = pneg %p62
      %p301 = pneg %p59
      %p302 = pneg %p83
      %p303 = pneg %p80
      %p304 = pneg %p104
      %p305 = pneg %p101
      %p306 = pneg %p125
      %p307 = pneg %p122
      %p308 = pneg %p146
      %p309 = pneg %p143
      %p310 = pneg %p167
      %p311 = pneg %p164
      %p312 = pneg %p188
      %p313 = pneg %p185
      %p314 = pneg %p209
      %p315 = pneg %p206
      %p316 = pneg %p235
      %p317 = pneg %p232
      %p318 = scmp.lt.s32.totalorder %s20, 1
      %s319 = scalar_select %p318, %s20, 1
      %s320 = smul.addr %s319, 4
      %s321 = smul.addr %s320, 8
      %s322 = scalar_lea.vmem %s9, %s321
      %p323 = scmp.lt.s32.totalorder %s20, 1
      %s324 = scalar_select %p323, %s20, 1
      %s325 = smul.addr %s324, 4
      %s326 = smul.addr %s325, 8
      %s327 = scalar_lea.vmem %s0, %s326
      %p328 = scmp.lt.s32.totalorder %s20, 1
      %s329 = scalar_select %p328, %s20, 1
      %s330 = smul.addr %s329, 4
      %s331 = smul.addr %s330, 8
      %s332 = scalar_lea.vmem %s9, %s331
      %v333 = vld [vmem:[%s327] sm:$0xff]
      %v334 = vld [vmem:[%s327 + $0x8] sm:$0xff]
      %v335 = vld [vmem:[%s327 + $0x10] sm:$0xff]
      %v336 = vld [vmem:[%s327 + $0x18] sm:$0xff]
      %v337 = vld [vmem:[%s3] sm:$0xff]
      %v338 = vld [vmem:[%s3 + $0x8] sm:$0xff]
      %v339 = vld [vmem:[%s3 + $0x10] sm:$0xff]
      %v340 = vld [vmem:[%s3 + $0x18] sm:$0xff]
      %vm341 = vcmask 261120
      %v343 = vsel %vm341, %v337, 0
      %v346 = vsel %vm341, %v338, 0
      %v349 = vsel %vm341, %v339, 0
      %v352 = vsel %vm341, %v340, 0
      %354 = vmatprep.subr.mxu0 0.0
      %355 = vmatpush1.msra.mxu0 0.0
      %356 = vmatprep.subr.mxu0 0.0
      %357 = vmatpush1.msra.mxu0 0.0
      %358 = vmatprep.subr.mxu0 0.0
      %359 = vmatpush1.msra.mxu0 0.0
      %360 = vmatprep.subr.mxu0 0.0
      %361 = vmatpush1.msra.mxu0 0.0
      %362 = vmatprep.subr.mxu0 0.0
      %363 = vmatpush1.msra.mxu0 0.0
      %364 = vmatprep.subr.mxu0 0.0
      %365 = vmatpush1.msra.mxu0 0.0
      %366 = vmatprep.subr.mxu0 0.0
      %367 = vmatpush1.msra.mxu0 0.0
      %368 = vmatprep.subr.mxu0 0.0
      %369 = vmatpush1.msra.mxu0 0.0
      %370 = vmatprep.subr.mxu0 0.0
      %371 = vmatpush1.msra.mxu0 0.0
      %372 = vmatprep.subr.mxu0 0.0
      %373 = vmatpush1.msra.mxu0 0.0
      %374 = vmatprep.subr.mxu0 0.0
      %375 = vmatpush1.msra.mxu0 0.0
      %376 = vmatprep.subr.mxu0 0.0
      %377 = vmatpush1.msra.mxu0 0.0
      %378 = vmatprep.subr.mxu0 0.0
      %379 = vmatpush1.msra.mxu0 %v336
      %380 = vmatprep.subr.mxu0 0.0
      %381 = vmatpush1.msra.mxu0 %v335
      %382 = vmatprep.subr.mxu0 0.0
      %383 = vmatpush1.msra.mxu0 %v334
      %384 = vmatprep.subr.mxu0 0.0
      %385 = vmatpush1.msra.mxu0 %v333
      %386 = vmatprep.subr.mxu0 0.0
      %387 = vmatpush2.msra.mxu0 0.0
      %388 = vmatprep.subr.mxu0 0.0
      %389 = vmatpush2.msra.mxu0 0.0
      %390 = vmatprep.subr.mxu0 0.0
      %391 = vmatpush2.msra.mxu0 0.0
      %392 = vmatprep.subr.mxu0 0.0
      %393 = vmatpush2.msra.mxu0 0.0
      %394 = vmatprep.subr.mxu0 0.0
      %395 = vmatpush2.msra.mxu0 0.0
      %396 = vmatprep.subr.mxu0 0.0
      %397 = vmatpush2.msra.mxu0 0.0
      %398 = vmatprep.subr.mxu0 0.0
      %399 = vmatpush2.msra.mxu0 0.0
      %400 = vmatprep.subr.mxu0 0.0
      %401 = vmatpush2.msra.mxu0 0.0
      %402 = vmatprep.subr.mxu0 0.0
      %403 = vmatpush2.msra.mxu0 0.0
      %404 = vmatprep.subr.mxu0 0.0
      %405 = vmatpush2.msra.mxu0 0.0
      %406 = vmatprep.subr.mxu0 0.0
      %407 = vmatpush2.msra.mxu0 0.0
      %408 = vmatprep.subr.mxu0 0.0
      %409 = vmatpush2.msra.mxu0 0.0
      %410 = vmatprep.subr.mxu0 0.0
      %411 = vmatpush2.msra.mxu0 0.0
      %412 = vmatprep.subr.mxu0 0.0
      %413 = vmatpush2.msra.mxu0 0.0
      %414 = vmatprep.subr.mxu0 0.0
      %415 = vmatpush2.msra.mxu0 0.0
      %416 = vmatprep.subr.mxu0 0.0
      %417 = vmatpush2.msra.mxu0 0.0
      %418 = vmatprep.mubr.f32.mxu0 0.0
      %419 = vmatmul.mubr.f32.gmra.mxu0 %v343
      %v420 = vpop.f32.mrf.mxu0
      %v421 = vadd.f32 0.0, %v420
      %v422 = vpop.f32.mrf.mxu0
      %423 = vmatprep.mubr.f32.mxu0 0.0
      %424 = vmatmul.mubr.f32.gmra.mxu0 %v346
      %v425 = vpop.f32.mrf.mxu0
      %v426 = vadd.f32 0.0, %v425
      %v427 = vpop.f32.mrf.mxu0
      %428 = vmatprep.mubr.f32.mxu0 0.0
      %429 = vmatmul.mubr.f32.gmra.mxu0 %v349
      %v430 = vpop.f32.mrf.mxu0
      %v431 = vadd.f32 0.0, %v430
      %v432 = vpop.f32.mrf.mxu0
      %433 = vmatprep.mubr.f32.mxu0 0.0
      %434 = vmatmul.mubr.f32.gmra.mxu0 %v352
      %v435 = vpop.f32.mrf.mxu0
      %v436 = vadd.f32 0.0, %v435
      %v437 = vpop.f32.mrf.mxu0
      %438 = vdwg.mxu0
      %v439 = vld [vmem:[%s4] sm:$0xff]
      %v440 = vld [vmem:[%s4 + $0x8] sm:$0xff]
      %vm441 = vcmask 130048
      %v443 = vsel %vm441, %v421, 0
      %v446 = vsel %vm441, %v426, 0
      %v449 = vsel %vm441, %v431, 0
      %v452 = vsel %vm441, %v436, 0
      %454 = vmatprep.subr.mxu0 0.0
      %455 = vmatpush1.msra.mxu0 0.0
      %456 = vmatprep.subr.mxu0 0.0
      %457 = vmatpush1.msra.mxu0 0.0
      %458 = vmatprep.subr.mxu0 0.0
      %459 = vmatpush1.msra.mxu0 0.0
      %460 = vmatprep.subr.mxu0 0.0
      %461 = vmatpush1.msra.mxu0 0.0
      %462 = vmatprep.subr.mxu0 0.0
      %463 = vmatpush1.msra.mxu0 0.0
      %464 = vmatprep.subr.mxu0 0.0
      %465 = vmatpush1.msra.mxu0 0.0
      %466 = vmatprep.subr.mxu0 0.0
      %467 = vmatpush1.msra.mxu0 0.0
      %468 = vmatprep.subr.mxu0 0.0
      %469 = vmatpush1.msra.mxu0 0.0
      %470 = vmatprep.subr.mxu0 0.0
      %471 = vmatpush1.msra.mxu0 0.0
      %472 = vmatprep.subr.mxu0 0.0
      %473 = vmatpush1.msra.mxu0 0.0
      %474 = vmatprep.subr.mxu0 0.0
      %475 = vmatpush1.msra.mxu0 0.0
      %476 = vmatprep.subr.mxu0 0.0
      %477 = vmatpush1.msra.mxu0 0.0
      %478 = vmatprep.subr.mxu0 0.0
      %479 = vmatpush1.msra.mxu0 0.0
      %480 = vmatprep.subr.mxu0 0.0
      %481 = vmatpush1.msra.mxu0 0.0
      %482 = vmatprep.subr.mxu0 0.0
      %483 = vmatpush1.msra.mxu0 %v440
      %484 = vmatprep.subr.mxu0 0.0
      %485 = vmatpush1.msra.mxu0 %v439
      %486 = vmatprep.subr.mxu0 0.0
      %487 = vmatpush2.msra.mxu0 0.0
      %488 = vmatprep.subr.mxu0 0.0
      %489 = vmatpush2.msra.mxu0 0.0
      %490 = vmatprep.subr.mxu0 0.0
      %491 = vmatpush2.msra.mxu0 0.0
      %492 = vmatprep.subr.mxu0 0.0
      %493 = vmatpush2.msra.mxu0 0.0
      %494 = vmatprep.subr.mxu0 0.0
      %495 = vmatpush2.msra.mxu0 0.0
      %496 = vmatprep.subr.mxu0 0.0
      %497 = vmatpush2.msra.mxu0 0.0
      %498 = vmatprep.subr.mxu0 0.0
      %499 = vmatpush2.msra.mxu0 0.0
      %500 = vmatprep.subr.mxu0 0.0
      %501 = vmatpush2.msra.mxu0 0.0
      %502 = vmatprep.subr.mxu0 0.0
      %503 = vmatpush2.msra.mxu0 0.0
      %504 = vmatprep.subr.mxu0 0.0
      %505 = vmatpush2.msra.mxu0 0.0
      %506 = vmatprep.subr.mxu0 0.0
      %507 = vmatpush2.msra.mxu0 0.0
      %508 = vmatprep.subr.mxu0 0.0
      %509 = vmatpush2.msra.mxu0 0.0
      %510 = vmatprep.subr.mxu0 0.0
      %511 = vmatpush2.msra.mxu0 0.0
      %512 = vmatprep.subr.mxu0 0.0
      %513 = vmatpush2.msra.mxu0 0.0
      %514 = vmatprep.subr.mxu0 0.0
      %515 = vmatpush2.msra.mxu0 0.0
      %516 = vmatprep.subr.mxu0 0.0
      %517 = vmatpush2.msra.mxu0 0.0
      %518 = vmatprep.mubr.f32.mxu0 0.0
      %519 = vmatmul.mubr.f32.gmra.mxu0 %v443
      %v520 = vpop.f32.mrf.mxu0
      %v521 = vadd.f32 0.0, %v520
      %v522 = vpop.f32.mrf.mxu0
      %523 = vmatprep.mubr.f32.mxu0 0.0
      %524 = vmatmul.mubr.f32.gmra.mxu0 %v446
      %v525 = vpop.f32.mrf.mxu0
      %v526 = vadd.f32 0.0, %v525
      %v527 = vpop.f32.mrf.mxu0
      %528 = vmatprep.mubr.f32.mxu0 0.0
      %529 = vmatmul.mubr.f32.gmra.mxu0 %v449
      %v530 = vpop.f32.mrf.mxu0
      %v531 = vadd.f32 0.0, %v530
      %v532 = vpop.f32.mrf.mxu0
      %533 = vmatprep.mubr.f32.mxu0 0.0
      %534 = vmatmul.mubr.f32.gmra.mxu0 %v452
      %v535 = vpop.f32.mrf.mxu0
      %v536 = vadd.f32 0.0, %v535
      %v537 = vpop.f32.mrf.mxu0
      %538 = vdwg.mxu0
      %v539 = vld [vmem:[%s5] sm:$0xff]
      %v540 = vld [vmem:[%s5 + $0x8] sm:$0xff]
      %541 = vmatprep.subr.mxu0 0.0
      %542 = vmatpush1.msra.mxu0 0.0
      %543 = vmatprep.subr.mxu0 0.0
      %544 = vmatpush1.msra.mxu0 0.0
      %545 = vmatprep.subr.mxu0 0.0
      %546 = vmatpush1.msra.mxu0 0.0
      %547 = vmatprep.subr.mxu0 0.0
      %548 = vmatpush1.msra.mxu0 0.0
      %549 = vmatprep.subr.mxu0 0.0
      %550 = vmatpush1.msra.mxu0 0.0
      %551 = vmatprep.subr.mxu0 0.0
      %552 = vmatpush1.msra.mxu0 0.0
      %553 = vmatprep.subr.mxu0 0.0
      %554 = vmatpush1.msra.mxu0 0.0
      %555 = vmatprep.subr.mxu0 0.0
      %556 = vmatpush1.msra.mxu0 0.0
      %557 = vmatprep.subr.mxu0 0.0
      %558 = vmatpush1.msra.mxu0 0.0
      %559 = vmatprep.subr.mxu0 0.0
      %560 = vmatpush1.msra.mxu0 0.0
      %561 = vmatprep.subr.mxu0 0.0
      %562 = vmatpush1.msra.mxu0 0.0
      %563 = vmatprep.subr.mxu0 0.0
      %564 = vmatpush1.msra.mxu0 0.0
      %565 = vmatprep.subr.mxu0 0.0
      %566 = vmatpush1.msra.mxu0 0.0
      %567 = vmatprep.subr.mxu0 0.0
      %568 = vmatpush1.msra.mxu0 0.0
      %569 = vmatprep.subr.mxu0 0.0
      %570 = vmatpush1.msra.mxu0 %v540
      %571 = vmatprep.subr.mxu0 0.0
      %572 = vmatpush1.msra.mxu0 %v539
      %573 = vmatprep.subr.mxu0 0.0
      %574 = vmatpush2.msra.mxu0 0.0
      %575 = vmatprep.subr.mxu0 0.0
      %576 = vmatpush2.msra.mxu0 0.0
      %577 = vmatprep.subr.mxu0 0.0
      %578 = vmatpush2.msra.mxu0 0.0
      %579 = vmatprep.subr.mxu0 0.0
      %580 = vmatpush2.msra.mxu0 0.0
      %581 = vmatprep.subr.mxu0 0.0
      %582 = vmatpush2.msra.mxu0 0.0
      %583 = vmatprep.subr.mxu0 0.0
      %584 = vmatpush2.msra.mxu0 0.0
      %585 = vmatprep.subr.mxu0 0.0
      %586 = vmatpush2.msra.mxu0 0.0
      %587 = vmatprep.subr.mxu0 0.0
      %588 = vmatpush2.msra.mxu0 0.0
      %589 = vmatprep.subr.mxu0 0.0
      %590 = vmatpush2.msra.mxu0 0.0
      %591 = vmatprep.subr.mxu0 0.0
      %592 = vmatpush2.msra.mxu0 0.0
      %593 = vmatprep.subr.mxu0 0.0
      %594 = vmatpush2.msra.mxu0 0.0
      %595 = vmatprep.subr.mxu0 0.0
      %596 = vmatpush2.msra.mxu0 0.0
      %597 = vmatprep.subr.mxu0 0.0
      %598 = vmatpush2.msra.mxu0 0.0
      %599 = vmatprep.subr.mxu0 0.0
      %600 = vmatpush2.msra.mxu0 0.0
      %601 = vmatprep.subr.mxu0 0.0
      %602 = vmatpush2.msra.mxu0 0.0
      %603 = vmatprep.subr.mxu0 0.0
      %604 = vmatpush2.msra.mxu0 0.0
      %605 = vmatprep.mubr.f32.mxu0 0.0
      %606 = vmatmul.mubr.f32.gmra.mxu0 %v443
      %v607 = vpop.f32.mrf.mxu0
      %v608 = vadd.f32 0.0, %v607
      %v609 = vpop.f32.mrf.mxu0
      %610 = vmatprep.mubr.f32.mxu0 0.0
      %611 = vmatmul.mubr.f32.gmra.mxu0 %v446
      %v612 = vpop.f32.mrf.mxu0
      %v613 = vadd.f32 0.0, %v612
      %v614 = vpop.f32.mrf.mxu0
      %615 = vmatprep.mubr.f32.mxu0 0.0
      %616 = vmatmul.mubr.f32.gmra.mxu0 %v449
      %v617 = vpop.f32.mrf.mxu0
      %v618 = vadd.f32 0.0, %v617
      %v619 = vpop.f32.mrf.mxu0
      %620 = vmatprep.mubr.f32.mxu0 0.0
      %621 = vmatmul.mubr.f32.gmra.mxu0 %v452
      %v622 = vpop.f32.mrf.mxu0
      %v623 = vadd.f32 0.0, %v622
      %v624 = vpop.f32.mrf.mxu0
      %625 = vdwg.mxu0
      %v626 = vsub.f32 %v521, %v618
      %v627 = vsub.f32 %v526, %v623
      %v628 = vadd.f32 %v608, %v531
      %v629 = vadd.f32 %v613, %v536
      %v630 = vld [vmem:[%s1] sm:$0xff]
      %v631 = vld [vmem:[%s1 + $0x8] sm:$0xff]
      %v632 = vld [vmem:[%s2] sm:$0xff]
      %v633 = vld [vmem:[%s2 + $0x8] sm:$0xff]
      %v634 = vmul.f32 %v626, %v630
      %v635 = vmul.f32 %v627, %v631
      %v636 = vmul.f32 %v628, %v632
      %v637 = vmul.f32 %v629, %v633
      %v638 = vsub.f32 %v634, %v636
      %v639 = vsub.f32 %v635, %v637
      %v640 = vmul.f32 %v626, %v632
      %v641 = vmul.f32 %v627, %v633
      %v642 = vmul.f32 %v628, %v630
      %v643 = vmul.f32 %v629, %v631
      %v644 = vadd.f32 %v640, %v642
      %v645 = vadd.f32 %v641, %v643
      %v646 = vld [vmem:[%s6] sm:$0xff]
      %v647 = vld [vmem:[%s6 + $0x8] sm:$0xff]
      %v648 = vld [vmem:[%s6 + $0x10] sm:$0xff]
      %v649 = vld [vmem:[%s6 + $0x18] sm:$0xff]
      %v651 = vsel %vm341, %v646, 0
      %v654 = vsel %vm341, %v647, 0
      %v657 = vsel %vm341, %v648, 0
      %v660 = vsel %vm341, %v649, 0
      %662 = vmatprep.subr.mxu0 0.0
      %663 = vmatpush1.msra.mxu0 0.0
      %664 = vmatprep.subr.mxu0 0.0
      %665 = vmatpush1.msra.mxu0 0.0
      %666 = vmatprep.subr.mxu0 0.0
      %667 = vmatpush1.msra.mxu0 0.0
      %668 = vmatprep.subr.mxu0 0.0
      %669 = vmatpush1.msra.mxu0 0.0
      %670 = vmatprep.subr.mxu0 0.0
      %671 = vmatpush1.msra.mxu0 0.0
      %672 = vmatprep.subr.mxu0 0.0
      %673 = vmatpush1.msra.mxu0 0.0
      %674 = vmatprep.subr.mxu0 0.0
      %675 = vmatpush1.msra.mxu0 0.0
      %676 = vmatprep.subr.mxu0 0.0
      %677 = vmatpush1.msra.mxu0 0.0
      %678 = vmatprep.subr.mxu0 0.0
      %679 = vmatpush1.msra.mxu0 0.0
      %680 = vmatprep.subr.mxu0 0.0
      %681 = vmatpush1.msra.mxu0 0.0
      %682 = vmatprep.subr.mxu0 0.0
      %683 = vmatpush1.msra.mxu0 0.0
      %684 = vmatprep.subr.mxu0 0.0
      %685 = vmatpush1.msra.mxu0 0.0
      %686 = vmatprep.subr.mxu0 0.0
      %687 = vmatpush1.msra.mxu0 %v645
      %688 = vmatprep.subr.mxu0 0.0
      %689 = vmatpush1.msra.mxu0 %v644
      %690 = vmatprep.subr.mxu0 0.0
      %691 = vmatpush1.msra.mxu0 %v639
      %692 = vmatprep.subr.mxu0 0.0
      %693 = vmatpush1.msra.mxu0 %v638
      %694 = vmatprep.subr.mxu0 0.0
      %695 = vmatpush2.msra.mxu0 0.0
      %696 = vmatprep.subr.mxu0 0.0
      %697 = vmatpush2.msra.mxu0 0.0
      %698 = vmatprep.subr.mxu0 0.0
      %699 = vmatpush2.msra.mxu0 0.0
      %700 = vmatprep.subr.mxu0 0.0
      %701 = vmatpush2.msra.mxu0 0.0
      %702 = vmatprep.subr.mxu0 0.0
      %703 = vmatpush2.msra.mxu0 0.0
      %704 = vmatprep.subr.mxu0 0.0
      %705 = vmatpush2.msra.mxu0 0.0
      %706 = vmatprep.subr.mxu0 0.0
      %707 = vmatpush2.msra.mxu0 0.0
      %708 = vmatprep.subr.mxu0 0.0
      %709 = vmatpush2.msra.mxu0 0.0
      %710 = vmatprep.subr.mxu0 0.0
      %711 = vmatpush2.msra.mxu0 0.0
      %712 = vmatprep.subr.mxu0 0.0
      %713 = vmatpush2.msra.mxu0 0.0
      %714 = vmatprep.subr.mxu0 0.0
      %715 = vmatpush2.msra.mxu0 0.0
      %716 = vmatprep.subr.mxu0 0.0
      %717 = vmatpush2.msra.mxu0 0.0
      %718 = vmatprep.subr.mxu0 0.0
      %719 = vmatpush2.msra.mxu0 0.0
      %720 = vmatprep.subr.mxu0 0.0
      %721 = vmatpush2.msra.mxu0 0.0
      %722 = vmatprep.subr.mxu0 0.0
      %723 = vmatpush2.msra.mxu0 0.0
      %724 = vmatprep.subr.mxu0 0.0
      %725 = vmatpush2.msra.mxu0 0.0
      %726 = vmatprep.mubr.f32.mxu0 0.0
      %727 = vmatmul.mubr.f32.gmra.mxu0 %v651
      %v728 = vpop.f32.mrf.mxu0
      %v729 = vadd.f32 0.0, %v728
      %v730 = vpop.f32.mrf.mxu0
      %731 = vmatprep.mubr.f32.mxu0 0.0
      %732 = vmatmul.mubr.f32.gmra.mxu0 %v654
      %v733 = vpop.f32.mrf.mxu0
      %v734 = vadd.f32 0.0, %v733
      %v735 = vpop.f32.mrf.mxu0
      %736 = vmatprep.mubr.f32.mxu0 0.0
      %737 = vmatmul.mubr.f32.gmra.mxu0 %v657
      %v738 = vpop.f32.mrf.mxu0
      %v739 = vadd.f32 0.0, %v738
      %v740 = vpop.f32.mrf.mxu0
      %741 = vmatprep.mubr.f32.mxu0 0.0
      %742 = vmatmul.mubr.f32.gmra.mxu0 %v660
      %v743 = vpop.f32.mrf.mxu0
      %v744 = vadd.f32 0.0, %v743
      %v745 = vpop.f32.mrf.mxu0
      %746 = vdwg.mxu0
      %v747 = vld [vmem:[%s7] sm:$0xff]
      %v748 = vld [vmem:[%s7 + $0x8] sm:$0xff]
      %v749 = vld [vmem:[%s7 + $0x10] sm:$0xff]
      %v750 = vld [vmem:[%s7 + $0x18] sm:$0xff]
      %v751 = vld [vmem:[%s7 + $0x20] sm:$0xff]
      %v752 = vld [vmem:[%s7 + $0x28] sm:$0xff]
      %vm753 = vcmask 392192
      %v755 = vsel %vm753, %v729, 0
      %v758 = vsel %vm753, %v734, 0
      %v761 = vsel %vm753, %v739, 0
      %v764 = vsel %vm753, %v744, 0
      %766 = vmatprep.subr.mxu0 0.0
      %767 = vmatpush1.msra.mxu0 0.0
      %768 = vmatprep.subr.mxu0 0.0
      %769 = vmatpush1.msra.mxu0 0.0
      %770 = vmatprep.subr.mxu0 0.0
      %771 = vmatpush1.msra.mxu0 0.0
      %772 = vmatprep.subr.mxu0 0.0
      %773 = vmatpush1.msra.mxu0 0.0
      %774 = vmatprep.subr.mxu0 0.0
      %775 = vmatpush1.msra.mxu0 0.0
      %776 = vmatprep.subr.mxu0 0.0
      %777 = vmatpush1.msra.mxu0 0.0
      %778 = vmatprep.subr.mxu0 0.0
      %779 = vmatpush1.msra.mxu0 0.0
      %780 = vmatprep.subr.mxu0 0.0
      %781 = vmatpush1.msra.mxu0 0.0
      %782 = vmatprep.subr.mxu0 0.0
      %783 = vmatpush1.msra.mxu0 0.0
      %784 = vmatprep.subr.mxu0 0.0
      %785 = vmatpush1.msra.mxu0 0.0
      %786 = vmatprep.subr.mxu0 0.0
      %787 = vmatpush1.msra.mxu0 %v752
      %788 = vmatprep.subr.mxu0 0.0
      %789 = vmatpush1.msra.mxu0 %v751
      %790 = vmatprep.subr.mxu0 0.0
      %791 = vmatpush1.msra.mxu0 %v750
      %792 = vmatprep.subr.mxu0 0.0
      %793 = vmatpush1.msra.mxu0 %v749
      %794 = vmatprep.subr.mxu0 0.0
      %795 = vmatpush1.msra.mxu0 %v748
      %796 = vmatprep.subr.mxu0 0.0
      %797 = vmatpush1.msra.mxu0 %v747
      %798 = vmatprep.subr.mxu0 0.0
      %799 = vmatpush2.msra.mxu0 0.0
      %800 = vmatprep.subr.mxu0 0.0
      %801 = vmatpush2.msra.mxu0 0.0
      %802 = vmatprep.subr.mxu0 0.0
      %803 = vmatpush2.msra.mxu0 0.0
      %804 = vmatprep.subr.mxu0 0.0
      %805 = vmatpush2.msra.mxu0 0.0
      %806 = vmatprep.subr.mxu0 0.0
      %807 = vmatpush2.msra.mxu0 0.0
      %808 = vmatprep.subr.mxu0 0.0
      %809 = vmatpush2.msra.mxu0 0.0
      %810 = vmatprep.subr.mxu0 0.0
      %811 = vmatpush2.msra.mxu0 0.0
      %812 = vmatprep.subr.mxu0 0.0
      %813 = vmatpush2.msra.mxu0 0.0
      %814 = vmatprep.subr.mxu0 0.0
      %815 = vmatpush2.msra.mxu0 0.0
      %816 = vmatprep.subr.mxu0 0.0
      %817 = vmatpush2.msra.mxu0 0.0
      %818 = vmatprep.subr.mxu0 0.0
      %819 = vmatpush2.msra.mxu0 0.0
      %820 = vmatprep.subr.mxu0 0.0
      %821 = vmatpush2.msra.mxu0 0.0
      %822 = vmatprep.subr.mxu0 0.0
      %823 = vmatpush2.msra.mxu0 0.0
      %824 = vmatprep.subr.mxu0 0.0
      %825 = vmatpush2.msra.mxu0 0.0
      %826 = vmatprep.subr.mxu0 0.0
      %827 = vmatpush2.msra.mxu0 0.0
      %828 = vmatprep.subr.mxu0 0.0
      %829 = vmatpush2.msra.mxu0 0.0
      %830 = vmatprep.mubr.f32.mxu0 0.0
      %831 = vmatmul.mubr.f32.gmra.mxu0 %v755
      %v832 = vpop.f32.mrf.mxu0
      %v833 = vadd.f32 0.0, %v832
      %v834 = vpop.f32.mrf.mxu0
      %835 = vmatprep.mubr.f32.mxu0 0.0
      %836 = vmatmul.mubr.f32.gmra.mxu0 %v758
      %v837 = vpop.f32.mrf.mxu0
      %v838 = vadd.f32 0.0, %v837
      %v839 = vpop.f32.mrf.mxu0
      %840 = vmatprep.mubr.f32.mxu0 0.0
      %841 = vmatmul.mubr.f32.gmra.mxu0 %v761
      %v842 = vpop.f32.mrf.mxu0
      %v843 = vadd.f32 0.0, %v842
      %v844 = vpop.f32.mrf.mxu0
      %845 = vmatprep.mubr.f32.mxu0 0.0
      %846 = vmatmul.mubr.f32.gmra.mxu0 %v764
      %v847 = vpop.f32.mrf.mxu0
      %v848 = vadd.f32 0.0, %v847
      %v849 = vpop.f32.mrf.mxu0
      %850 = vdwg.mxu0
      %v851 = vld [vmem:[%s8] sm:$0xff]
      %v852 = vld [vmem:[%s8 + $0x8] sm:$0xff]
      %v853 = vld [vmem:[%s8 + $0x10] sm:$0xff]
      %v854 = vld [vmem:[%s8 + $0x18] sm:$0xff]
      %v855 = vld [vmem:[%s8 + $0x20] sm:$0xff]
      %v856 = vld [vmem:[%s8 + $0x28] sm:$0xff]
      %857 = vmatprep.subr.mxu0 0.0
      %858 = vmatpush1.msra.mxu0 0.0
      %859 = vmatprep.subr.mxu0 0.0
      %860 = vmatpush1.msra.mxu0 0.0
      %861 = vmatprep.subr.mxu0 0.0
      %862 = vmatpush1.msra.mxu0 0.0
      %863 = vmatprep.subr.mxu0 0.0
      %864 = vmatpush1.msra.mxu0 0.0
      %865 = vmatprep.subr.mxu0 0.0
      %866 = vmatpush1.msra.mxu0 0.0
      %867 = vmatprep.subr.mxu0 0.0
      %868 = vmatpush1.msra.mxu0 0.0
      %869 = vmatprep.subr.mxu0 0.0
      %870 = vmatpush1.msra.mxu0 0.0
      %871 = vmatprep.subr.mxu0 0.0
      %872 = vmatpush1.msra.mxu0 0.0
      %873 = vmatprep.subr.mxu0 0.0
      %874 = vmatpush1.msra.mxu0 0.0
      %875 = vmatprep.subr.mxu0 0.0
      %876 = vmatpush1.msra.mxu0 0.0
      %877 = vmatprep.subr.mxu0 0.0
      %878 = vmatpush1.msra.mxu0 %v856
      %879 = vmatprep.subr.mxu0 0.0
      %880 = vmatpush1.msra.mxu0 %v855
      %881 = vmatprep.subr.mxu0 0.0
      %882 = vmatpush1.msra.mxu0 %v854
      %883 = vmatprep.subr.mxu0 0.0
      %884 = vmatpush1.msra.mxu0 %v853
      %885 = vmatprep.subr.mxu0 0.0
      %886 = vmatpush1.msra.mxu0 %v852
      %887 = vmatprep.subr.mxu0 0.0
      %888 = vmatpush1.msra.mxu0 %v851
      %889 = vmatprep.subr.mxu0 0.0
      %890 = vmatpush2.msra.mxu0 0.0
      %891 = vmatprep.subr.mxu0 0.0
      %892 = vmatpush2.msra.mxu0 0.0
      %893 = vmatprep.subr.mxu0 0.0
      %894 = vmatpush2.msra.mxu0 0.0
      %895 = vmatprep.subr.mxu0 0.0
      %896 = vmatpush2.msra.mxu0 0.0
      %897 = vmatprep.subr.mxu0 0.0
      %898 = vmatpush2.msra.mxu0 0.0
      %899 = vmatprep.subr.mxu0 0.0
      %900 = vmatpush2.msra.mxu0 0.0
      %901 = vmatprep.subr.mxu0 0.0
      %902 = vmatpush2.msra.mxu0 0.0
      %903 = vmatprep.subr.mxu0 0.0
      %904 = vmatpush2.msra.mxu0 0.0
      %905 = vmatprep.subr.mxu0 0.0
      %906 = vmatpush2.msra.mxu0 0.0
      %907 = vmatprep.subr.mxu0 0.0
      %908 = vmatpush2.msra.mxu0 0.0
      %909 = vmatprep.subr.mxu0 0.0
      %910 = vmatpush2.msra.mxu0 0.0
      %911 = vmatprep.subr.mxu0 0.0
      %912 = vmatpush2.msra.mxu0 0.0
      %913 = vmatprep.subr.mxu0 0.0
      %914 = vmatpush2.msra.mxu0 0.0
      %915 = vmatprep.subr.mxu0 0.0
      %916 = vmatpush2.msra.mxu0 0.0
      %917 = vmatprep.subr.mxu0 0.0
      %918 = vmatpush2.msra.mxu0 0.0
      %919 = vmatprep.subr.mxu0 0.0
      %920 = vmatpush2.msra.mxu0 0.0
      %921 = vmatprep.mubr.f32.mxu0 0.0
      %922 = vmatmul.mubr.f32.gmra.mxu0 %v755
      %v923 = vpop.f32.mrf.mxu0
      %v924 = vadd.f32 0.0, %v923
      %v925 = vpop.f32.mrf.mxu0
      %926 = vmatprep.mubr.f32.mxu0 0.0
      %927 = vmatmul.mubr.f32.gmra.mxu0 %v758
      %v928 = vpop.f32.mrf.mxu0
      %v929 = vadd.f32 0.0, %v928
      %v930 = vpop.f32.mrf.mxu0
      %931 = vmatprep.mubr.f32.mxu0 0.0
      %932 = vmatmul.mubr.f32.gmra.mxu0 %v761
      %v933 = vpop.f32.mrf.mxu0
      %v934 = vadd.f32 0.0, %v933
      %v935 = vpop.f32.mrf.mxu0
      %936 = vmatprep.mubr.f32.mxu0 0.0
      %937 = vmatmul.mubr.f32.gmra.mxu0 %v764
      %v938 = vpop.f32.mrf.mxu0
      %v939 = vadd.f32 0.0, %v938
      %v940 = vpop.f32.mrf.mxu0
      %941 = vdwg.mxu0
      %v942 = vsub.f32 %v833, %v934
      %v943 = vsub.f32 %v838, %v939
      %944 = vst.msk [vmem:[%s332] sm:$0xff] %vm753, %v942
      %945 = vst.msk [vmem:[%s332 + $0x8] sm:$0xff] %vm753, %v943
      %v946 = vadd.f32 %v924, %v843
      %v947 = vadd.f32 %v929, %v848
      %948 = vst.msk [vmem:[%s332 + $0x10] sm:$0xff] %vm753, %v946
      %949 = vst.msk [vmem:[%s332 + $0x18] sm:$0xff] %vm753, %v947
      %p950 = scmp.lt.s32.totalorder %s20, 1
      %s951 = scalar_select %p950, %s20, 1
      %s952 = smul.addr %s951, 4
      %s953 = smul.addr %s952, 8
      %s954 = scalar_lea.vmem %s9, %s953
      // Predicated region
      $region57: #{fresnel_forward.1} parent=55 // pred_check
        %p955 = pneg %p232
      $region58: #{fresnel_forward.1} parent=55 // pred_check_branch
        %957 = sbr.rel (%p955) target = $region60
      $region59: #{fresnel_forward.1} parent=55 // pred_region
        _
      $region60: #{fresnel_forward.1} parent=55 // pred_fallthru
        _
    $region56: #{fresnel_forward.1} parent=5 // pred_fallthru
      _
    %p958 = scmp.le.s32.totalorder 2, %s15
    // Predicated region
    $region61: #{fresnel_forward.1} parent=5 // pred_check
      %p959 = pneg %p958
    $region62: #{fresnel_forward.1} parent=5 // pred_check_branch
      %961 = sbr.rel (%p959) target = $region64
    $region63: #{fresnel_forward.1} parent=5 // pred_region
      %s962 = ssub.s32 %s15, 2
      // Predicated region
      $region65: #{fresnel_forward.1} parent=63 // pred_check
        %p963 = pneg %p238
      $region66: #{fresnel_forward.1} parent=63 // pred_check_branch
        %965 = sbr.rel (%p963) target = $region68
      $region67: #{fresnel_forward.1} parent=63 // pred_region
        %p966 = scmp.lt.s32.totalorder %s21, 1
        %s967 = scalar_select %p966, %s21, 1
        %s968 = smul.addr %s967, 4
        %s969 = smul.addr %s968, 8
        %s970 = scalar_lea.vmem %s9, %s969
      $region68: #{fresnel_forward.1} parent=63 // pred_fallthru
        _
    $region64: #{fresnel_forward.1} parent=5 // pred_fallthru
      _
  $region6: #{fresnel_forward.1} parent=0 // loop_footer
    %s19 = sadd.s32 1, %s15
  $region7: #{fresnel_forward.1} parent=0 // loop_footer_branch
    %14 = sbr.rel target = $region3
  $region8: #{fresnel_forward.1} parent=0 // loop_exit
    _

</llo_original>
